<compile_context>
chip_gen: v6e
topology: v6e:2x2x1
jax: 0.10.0
libtpu: 0.0.40
codegen_flags: <defaults>
</compile_context>

<pallas_src>
import functools

import jax
import jax.numpy as jnp
from jax import lax
from jax.experimental import pallas as pl
from jax.experimental.pallas import tpu as pltpu

BN_EPS = 1e-5


def _round_up(x, m):
    return (x + m - 1) // m * m


# ---------------------------------------------------------------------------
# Phase 1: per B-tile   z = relu(x @ W_ext + b)   + per-tile BN partial stats
# ---------------------------------------------------------------------------
def _fwd_stats_kernel(x_ref, w_ref, b_ref, z_ref, sum_ref, sq_ref, *,
                      tile_b, b_real):
    i = pl.program_id(0)

    # Single MXU matmul: the Farkas column is baked into w_ref, so no
    # in-kernel row reduction / iota / select is needed.
    z = jnp.dot(x_ref[...], w_ref[...], preferred_element_type=jnp.float32)
    z = jnp.maximum(z + b_ref[...], 0.0)        # pre-fixed bias + ReLU
    z_ref[...] = z.astype(z_ref.dtype)

    # BatchNorm partial statistics for this tile; exclude zero-padded rows
    # (their relu(bias) values must not pollute the batch statistics).
    row = i * tile_b + lax.broadcasted_iota(jnp.int32, z.shape, 0)
    zm = jnp.where(row < b_real, z, 0.0)
    sum_ref[...] = jnp.sum(zm, axis=0, keepdims=True)[None]       # (1,1,out_pad)
    sq_ref[...] = jnp.sum(zm * zm, axis=0, keepdims=True)[None]   # (1,1,out_pad)


# ---------------------------------------------------------------------------
# Phase 2: normalize each B-tile with the global batch statistics
# ---------------------------------------------------------------------------
def _bn_kernel(z_ref, mu_ref, inv_ref, o_ref):
    o_ref[...] = ((z_ref[...] - mu_ref[...]) * inv_ref[...]).astype(o_ref.dtype)


def prepare_farkas_params(weight, bias, out_pad):
    """Fold the Farkas column into the weight and pre-fix the bias.

    ybar = mean(-x @ W.T, axis=1) = x @ (-mean(W, axis=0)), so the extra
    output column is just another weight column.  Doing this (and the bias
    fixup) once in plain JAX removes all cross-lane reductions / iota /
    selects from the kernel and is amortizable when the weights are static.
    """
    out_dim = bias.shape[0]
    w_t = jnp.transpose(weight)                                # (in_dim, out_dim-1)
    w_bar = -jnp.mean(w_t, axis=1, keepdims=True)              # (in_dim, 1)
    w_ext = jnp.concatenate([w_t, w_bar], axis=1)              # (in_dim, out_dim)
    w_ext = jnp.pad(w_ext, ((0, 0), (0, out_pad - out_dim)))   # lane-dense cols

    bbar = jnp.maximum(-jnp.mean(bias[:-1]), bias[-1])
    b_full = jnp.concatenate([bias[:-1], bbar[None]], axis=0)
    b_full = jnp.pad(b_full, (0, out_pad - out_dim)).reshape(1, out_pad)
    return w_ext.astype(jnp.float32), b_full.astype(jnp.float32)


def farkas_linear(x, weight, bias, *, tile_b=None):
    """x: (B, in_dim) f32; weight: (out_dim-1, in_dim); bias: (out_dim,)."""
    B, in_dim = x.shape
    out_dim = bias.shape[0]
    assert weight.shape == (out_dim - 1, in_dim)

    out_pad = _round_up(out_dim, 128)           # lane-dense, unmasked stores
    w_ext, b_full = prepare_farkas_params(weight, bias, out_pad)

    # Batch tiling: multiples of 8 sublanes; capped so the double-buffered
    # blocks fit comfortably inside scoped VMEM on v5e/v6e/v7x.
    # TODO(synk): add K (in_dim) tiling with a VMEM accumulator for very large in_dim.
    if tile_b is None:
        tile_b = min(256, _round_up(B, 8))
    tile_b = _round_up(tile_b, 8)
    b_pad = _round_up(B, tile_b)
    if b_pad != B:
        x = jnp.pad(x, ((0, b_pad - B), (0, 0)))
    num_tiles = b_pad // tile_b

    kernel = functools.partial(_fwd_stats_kernel, tile_b=tile_b, b_real=B)
    z, sums, sqs = pl.pallas_call(
        kernel,
        out_shape=(
            jax.ShapeDtypeStruct((b_pad, out_pad), jnp.float32),
            jax.ShapeDtypeStruct((num_tiles, 1, out_pad), jnp.float32),
            jax.ShapeDtypeStruct((num_tiles, 1, out_pad), jnp.float32),
        ),
        grid=(num_tiles,),
        in_specs=[
            pl.BlockSpec((tile_b, in_dim), lambda i: (i, 0)),
            pl.BlockSpec((in_dim, out_pad), lambda i: (0, 0)),
            pl.BlockSpec((1, out_pad), lambda i: (0, 0)),
        ],
        out_specs=(
            pl.BlockSpec((tile_b, out_pad), lambda i: (i, 0)),
            pl.BlockSpec((1, 1, out_pad), lambda i: (i, 0, 0)),
            pl.BlockSpec((1, 1, out_pad), lambda i: (i, 0, 0)),
        ),
        compiler_params=pltpu.CompilerParams(
            dimension_semantics=("parallel",)),
    )(x, w_ext, b_full)

    # Tiny global reduction of the per-tile partials (plain JAX).
    total_sum = jnp.sum(sums, axis=0)                 # (1, out_pad)
    total_sq = jnp.sum(sqs, axis=0)                   # (1, out_pad)
    mu = total_sum / B
    var = total_sq / B - mu * mu                      # biased variance
    inv = lax.rsqrt(var + BN_EPS)

    out = pl.pallas_call(
        _bn_kernel,
        out_shape=jax.ShapeDtypeStruct((b_pad, out_pad), jnp.float32),
        grid=(num_tiles,),
        in_specs=[
            pl.BlockSpec((tile_b, out_pad), lambda i: (i, 0)),
            pl.BlockSpec((1, out_pad), lambda i: (0, 0)),
            pl.BlockSpec((1, out_pad), lambda i: (0, 0)),
        ],
        out_specs=pl.BlockSpec((tile_b, out_pad), lambda i: (i, 0)),
        compiler_params=pltpu.CompilerParams(
            dimension_semantics=("parallel",)),
    )(z, mu, inv)

    return out[:B, :out_dim]


def farkas_linear_ref(x, weight, bias):
    """Pure-JAX reference mirroring the PyTorch forward."""
    out_dim = bias.shape[0]
    y = x @ weight.T
    ybar = jnp.mean(-y, axis=1, keepdims=True)
    y = jnp.concatenate([y, ybar], axis=1)
    bbar = jnp.maximum(-jnp.mean(bias[:-1]), bias[-1])
    b = jnp.concatenate([bias[:-1], bbar[None]], axis=0)
    y = y + b.reshape(1, out_dim)
    y = jax.nn.relu(y)
    mu = jnp.mean(y, axis=0, keepdims=True)
    var = jnp.mean((y - mu) ** 2, axis=0, keepdims=True)
    return (y - mu) / jnp.sqrt(var + BN_EPS)


if __name__ == "__main__":
    # TODO(synk): dropout>0 not implemented (module default dropout=0.0 disables it).
    B, in_dim, out_dim = 12, 32, 16     # B not a multiple of the 16-row tile -> exercises row masking
    key = jax.random.PRNGKey(0)
    kx, kw, kb = jax.random.split(key, 3)

    # 'standard' init: uniform(-1/sqrt(in_dim), 1/sqrt(in_dim))
    stdv = 1.0 / (in_dim ** 0.5)
    weight = jax.random.uniform(kw, (out_dim - 1, in_dim), jnp.float32, -stdv, stdv)
    bias = jax.random.uniform(kb, (out_dim,), jnp.float32, -stdv, stdv)
    x = jax.random.normal(kx, (B, in_dim), jnp.float32)

    out = jax.block_until_ready(farkas_linear(x, weight, bias))
    ref = farkas_linear_ref(x, weight, bias)
    assert out.shape == (B, out_dim)
    assert jnp.allclose(out, ref, rtol=1e-4, atol=1e-4), (
        f"max abs diff {float(jnp.max(jnp.abs(out - ref)))}"
    )
    print("KERNEL_OK")
</pallas_src>

<mosaic_0001>
module attributes {stable_mosaic.version = 11 : i64} {
  func.func @_fwd_stats_kernel(%arg0: i32, %arg1: memref<16x32xf32, #tpu.memory_space<vmem>>, %arg2: memref<32x128xf32, #tpu.memory_space<vmem>>, %arg3: memref<1x128xf32, #tpu.memory_space<vmem>>, %arg4: memref<16x128xf32, #tpu.memory_space<vmem>>, %arg5: memref<1x1x128xf32, #tpu.memory_space<vmem>>, %arg6: memref<1x1x128xf32, #tpu.memory_space<vmem>>) attributes {dimension_semantics = [#tpu.dimension_semantics<parallel>], iteration_bounds = array<i64: 1>, scalar_prefetch = 0 : i64, scratch_operands = 0 : i64, tpu.core_type = #tpu.core_type<tc>, window_params = [{transform_indices = @transform_0, window_bounds = array<i64: 16, 32>}, {pipeline_mode = #tpu.pipeline_mode<synchronous>, transform_indices = @transform_1, window_bounds = array<i64: 32, 128>}, {pipeline_mode = #tpu.pipeline_mode<synchronous>, transform_indices = @transform_2, window_bounds = array<i64: 1, 128>}, {transform_indices = @transform_3, window_bounds = array<i64: 16, 128>}, {transform_indices = @transform_4, window_bounds = array<i64: 1, 1, 128>}, {transform_indices = @transform_5, window_bounds = array<i64: 1, 1, 128>}]} {
    %c0 = arith.constant 0 : index
    %c0_0 = arith.constant 0 : index
    %0 = vector.load %arg1[%c0, %c0_0] : memref<16x32xf32, #tpu.memory_space<vmem>>, vector<16x32xf32>
    %c0_1 = arith.constant 0 : index
    %c0_2 = arith.constant 0 : index
    %1 = vector.load %arg2[%c0_1, %c0_2] : memref<32x128xf32, #tpu.memory_space<vmem>>, vector<32x128xf32>
    %cst = arith.constant dense<0.000000e+00> : vector<16x128xf32>
    %2 = tpu.matmul %0, %1, %cst {dimension_numbers = #tpu.dot_dimension_numbers<[1], [0], [0], [1], [0, 0, 1, 1], [], []>} : vector<16x32xf32>, vector<32x128xf32>, vector<16x128xf32> -> vector<16x128xf32>
    %c0_3 = arith.constant 0 : index
    %c0_4 = arith.constant 0 : index
    %3 = vector.load %arg3[%c0_3, %c0_4] : memref<1x128xf32, #tpu.memory_space<vmem>>, vector<1x128xf32>
    %4 = vector.broadcast %3 : vector<1x128xf32> to vector<16x128xf32>
    %5 = arith.addf %2, %4 : vector<16x128xf32>
    %cst_5 = arith.constant 0.000000e+00 : f32
    %6 = vector.broadcast %cst_5 : f32 to vector<16x128xf32>
    %7 = arith.maximumf %5, %6 : vector<16x128xf32>
    %c0_6 = arith.constant 0 : index
    %c0_7 = arith.constant 0 : index
    %8 = vector.load %arg4[%c0_6, %c0_7] : memref<16x128xf32, #tpu.memory_space<vmem>>, vector<16x128xf32>
    tpu.vector_store %arg4[%c0_6, %c0_7], %7 {strides = array<i32>} : memref<16x128xf32, #tpu.memory_space<vmem>>, vector<16x128xf32>,
    %c16_i32 = arith.constant 16 : i32
    %9 = arith.muli %arg0, %c16_i32 : i32
    %10 = tpu.iota {dimensions = array<i32: 0>} : vector<16x128xi32>
    %11 = vector.broadcast %9 : i32 to vector<16x128xi32>
    %12 = arith.addi %11, %10 : vector<16x128xi32>
    %c12_i32 = arith.constant 12 : i32
    %13 = vector.broadcast %c12_i32 : i32 to vector<16x128xi32>
    %14 = arith.cmpi slt, %12, %13 : vector<16x128xi32>
    %cst_8 = arith.constant 0.000000e+00 : f32
    %15 = vector.broadcast %cst_8 : f32 to vector<16x128xf32>
    %16 = arith.select %14, %7, %15 : vector<16x128xi1>, vector<16x128xf32>
    %cst_9 = arith.constant dense<0.000000e+00> : vector<128xf32>
    %17 = vector.multi_reduction <add>, %16, %cst_9 [0] : vector<16x128xf32> to vector<128xf32>
    %18 = vector.shape_cast %17 : vector<128xf32> to vector<1x128xf32>
    %19 = vector.shape_cast %18 : vector<1x128xf32> to vector<1x1x128xf32>
    %c0_10 = arith.constant 0 : index
    %c0_11 = arith.constant 0 : index
    %c0_12 = arith.constant 0 : index
    %20 = vector.load %arg5[%c0_10, %c0_11, %c0_12] : memref<1x1x128xf32, #tpu.memory_space<vmem>>, vector<1x1x128xf32>
    tpu.vector_store %arg5[%c0_10, %c0_11, %c0_12], %19 {strides = array<i32>} : memref<1x1x128xf32, #tpu.memory_space<vmem>>, vector<1x1x128xf32>,
    %21 = arith.mulf %16, %16 : vector<16x128xf32>
    %cst_13 = arith.constant dense<0.000000e+00> : vector<128xf32>
    %22 = vector.multi_reduction <add>, %21, %cst_13 [0] : vector<16x128xf32> to vector<128xf32>
    %23 = vector.shape_cast %22 : vector<128xf32> to vector<1x128xf32>
    %24 = vector.shape_cast %23 : vector<1x128xf32> to vector<1x1x128xf32>
    %c0_14 = arith.constant 0 : index
    %c0_15 = arith.constant 0 : index
    %c0_16 = arith.constant 0 : index
    %25 = vector.load %arg6[%c0_14, %c0_15, %c0_16] : memref<1x1x128xf32, #tpu.memory_space<vmem>>, vector<1x1x128xf32>
    tpu.vector_store %arg6[%c0_14, %c0_15, %c0_16], %24 {strides = array<i32>} : memref<1x1x128xf32, #tpu.memory_space<vmem>>, vector<1x1x128xf32>,
    return
  }
  func.func @transform_0(%arg0: i32) -> (i32, i32) {
    %c0_i32 = arith.constant 0 : i32
    %c0_i32_0 = arith.constant 0 : i32
    return %arg0, %c0_i32 : i32, i32
  }
  func.func @transform_1(%arg0: i32) -> (i32, i32) {
    %c0_i32 = arith.constant 0 : i32
    %c0_i32_0 = arith.constant 0 : i32
    %c0_i32_1 = arith.constant 0 : i32
    return %c0_i32, %c0_i32_0 : i32, i32
  }
  func.func @transform_2(%arg0: i32) -> (i32, i32) {
    %c0_i32 = arith.constant 0 : i32
    %c0_i32_0 = arith.constant 0 : i32
    %c0_i32_1 = arith.constant 0 : i32
    return %c0_i32, %c0_i32_0 : i32, i32
  }
  func.func @transform_3(%arg0: i32) -> (i32, i32) {
    %c0_i32 = arith.constant 0 : i32
    %c0_i32_0 = arith.constant 0 : i32
    return %arg0, %c0_i32 : i32, i32
  }
  func.func @transform_4(%arg0: i32) -> (i32, i32, i32) {
    %c0_i32 = arith.constant 0 : i32
    %c0_i32_0 = arith.constant 0 : i32
    %c0_i32_1 = arith.constant 0 : i32
    return %arg0, %c0_i32, %c0_i32_0 : i32, i32, i32
  }
  func.func @transform_5(%arg0: i32) -> (i32, i32, i32) {
    %c0_i32 = arith.constant 0 : i32
    %c0_i32_0 = arith.constant 0 : i32
    %c0_i32_1 = arith.constant 0 : i32
    return %arg0, %c0_i32, %c0_i32_0 : i32, i32, i32
  }
}

</mosaic_0001>

<llo_original>
// kernel: tpu_custom_call.1
$region0: #{tpu_custom_call.1}
  #allocation0 [shape = 'u32[]', space=smem, size = 0x4, offset = 0x4, fixed_abs, tag = 'smem constant byte address 0x4 - core index']
  #allocation1 [shape = 'u32[144,128]{1,0:T(1,128)}', space=vmem, size = 0x12000, scoped, tag = 'internal scratch']
  %s0 = inlined_call_operand.hbm [shape: f32[16,32], index: 0, kind: input, shape index: {}]
  %s1 = inlined_call_operand.hbm [shape: f32[32,128], index: 1, kind: input, shape index: {}]
  %s2 = inlined_call_operand.vmem [shape: f32[1,128], index: 2, kind: input, shape index: {}]
  %s3 = inlined_call_operand.hbm [shape: f32[16,128], index: 3, kind: output, shape index: {0}]
  %s4 = inlined_call_operand.hbm [shape: f32[1,1,128], index: 4, kind: output, shape index: {1}]
  %s5 = inlined_call_operand.hbm [shape: f32[1,1,128], index: 5, kind: output, shape index: {2}]
  %6 = xla_tuple %s3, %s4, %s5
  %s7 = sld [smem:[#allocation0]]
  $region46: #{tpu_custom_call.1} parent=0
    _
  %s9 = ssub.s32 1, %s7
  %s10 = scalar_select 0, %s9, %s7
  $region1: #{tpu_custom_call.1} parent=0
    #allocation2 [shape = 'u8[8192]{0}', space=vmem, size = 0x2000, scoped, tag = 'input window, operand 0, single buffered']
    #allocation3 [shape = 's32[1]{0}', space=sflag, size = 0x4, scoped, tag = 'scoped memory for tpu_custom_call.1']
    #allocation4 [shape = 's32[1]{0}', space=sflag, size = 0x4, scoped, tag = 'scoped memory for tpu_custom_call.1']
    #allocation5 [shape = 'u8[16384]{0}', space=vmem, size = 0x4000, scoped, tag = 'input window, operand 1, single buffered']
    #allocation6 [shape = 's32[1]{0}', space=sflag, size = 0x4, scoped, tag = 'scoped memory for tpu_custom_call.1']
    #allocation7 [shape = 'u8[8192]{0}', space=vmem, size = 0x2000, scoped, tag = 'output window, operand 0, single buffered']
    #allocation8 [shape = 'u8[512]{0}', space=vmem, size = 0x400, scoped, tag = 'output window, operand 1, single buffered']
    #allocation9 [shape = 's32[1]{0}', space=sflag, size = 0x4, scoped, tag = 'scoped memory for tpu_custom_call.1']
    #allocation10 [shape = 'u8[512]{0}', space=vmem, size = 0x400, scoped, tag = 'output window, operand 2, single buffered']
    %11 = vsyncpa [#allocation3], 0
    %12 = vsyncpa [#allocation6], 0
    %13 = vsyncpa [#allocation4], 0
    %14 = vsyncpa [#allocation9], 0
    // Predicated region
    $region2: #{tpu_custom_call.1} parent=1 // pred_check
      _
    $region3: #{tpu_custom_call.1} parent=1 // pred_check_branch
      %16 = sbr.rel (0) target = $region5
    $region4: #{tpu_custom_call.1} parent=1 // pred_region
      %s18 = ssub.s32 256, 256
      %19 = vsyncadd [#allocation3], %s18
      %s20 = sshll.u32 [#allocation2], 4
      %s21 = int_to_ptr.vmem [resolvable:$true] %s20
      %26 = dma.hbm_to_vmem [thread:$0]  %s0, 256, %s21, [#allocation3], 128, 128, 8
    $region5: #{tpu_custom_call.1} parent=1 // pred_fallthru
      _
    // Predicated region
    $region6: #{tpu_custom_call.1} parent=1 // pred_check
      _
    $region7: #{tpu_custom_call.1} parent=1 // pred_check_branch
      %28 = sbr.rel (0) target = $region9
    $region8: #{tpu_custom_call.1} parent=1 // pred_region
      %s30 = ssub.s32 512, 512
      %31 = vsyncadd [#allocation6], %s30
      %s32 = sshll.u32 [#allocation5], 4
      %s33 = int_to_ptr.vmem [resolvable:$true] %s32
      %38 = dma.hbm_to_vmem [thread:$0]  %s1, 512, %s33, [#allocation6], 128, 128, 8
    $region9: #{tpu_custom_call.1} parent=1 // pred_fallthru
      _
    // Predicated region
    $region10: #{tpu_custom_call.1} parent=1 // pred_check
      _
    $region11: #{tpu_custom_call.1} parent=1 // pred_check_branch
      %40 = sbr.rel (0) target = $region13
    $region12: #{tpu_custom_call.1} parent=1 // pred_region
      _
    $region13: #{tpu_custom_call.1} parent=1 // pred_fallthru
      _
    // Predicated region
    $region14: #{tpu_custom_call.1} parent=1 // pred_check
      _
    $region15: #{tpu_custom_call.1} parent=1 // pred_check_branch
      %42 = sbr.rel (0) target = $region17
    $region16: #{tpu_custom_call.1} parent=1 // pred_region
      %43 = dma.done [#allocation3], 256
    $region17: #{tpu_custom_call.1} parent=1 // pred_fallthru
      _
    // Predicated region
    $region18: #{tpu_custom_call.1} parent=1 // pred_check
      _
    $region19: #{tpu_custom_call.1} parent=1 // pred_check_branch
      %45 = sbr.rel (0) target = $region21
    $region20: #{tpu_custom_call.1} parent=1 // pred_region
      %46 = dma.done [#allocation6], 512
    $region21: #{tpu_custom_call.1} parent=1 // pred_fallthru
      _
    %v47 = vld [vmem:[#allocation2] sm:$0xff]
    %v48 = vld [vmem:[#allocation2 + $0x8] sm:$0xff]
    %v49 = vld [vmem:[#allocation5] sm:$0xff]
    %v50 = vld [vmem:[#allocation5 + $0x8] sm:$0xff]
    %v51 = vld [vmem:[#allocation5 + $0x10] sm:$0xff]
    %v52 = vld [vmem:[#allocation5 + $0x18] sm:$0xff]
    %v53 = vld [vmem:[%s2] sm:$0x1]
    %v55 = vlaneseq
    %v56 = vshrl.u32 %v55, 7
    %v57 = vsub.s32 0, %v56
    %v58 = vrot.slane %v53, %v57
    %vm60 = vcmask 261120
    %v62 = vsel %vm60, %v47, 0
    %v65 = vsel %vm60, %v48, 0
    %67 = vmatprep.subr.mxu0 0.0
    %68 = vmatpush1.msra.mxu0 0.0
    %69 = vmatprep.subr.mxu0 0.0
    %70 = vmatpush1.msra.mxu0 0.0
    %71 = vmatprep.subr.mxu0 0.0
    %72 = vmatpush1.msra.mxu0 0.0
    %73 = vmatprep.subr.mxu0 0.0
    %74 = vmatpush1.msra.mxu0 0.0
    %75 = vmatprep.subr.mxu0 0.0
    %76 = vmatpush1.msra.mxu0 0.0
    %77 = vmatprep.subr.mxu0 0.0
    %78 = vmatpush1.msra.mxu0 0.0
    %79 = vmatprep.subr.mxu0 0.0
    %80 = vmatpush1.msra.mxu0 0.0
    %81 = vmatprep.subr.mxu0 0.0
    %82 = vmatpush1.msra.mxu0 0.0
    %83 = vmatprep.subr.mxu0 0.0
    %84 = vmatpush1.msra.mxu0 0.0
    %85 = vmatprep.subr.mxu0 0.0
    %86 = vmatpush1.msra.mxu0 0.0
    %87 = vmatprep.subr.mxu0 0.0
    %88 = vmatpush1.msra.mxu0 0.0
    %89 = vmatprep.subr.mxu0 0.0
    %90 = vmatpush1.msra.mxu0 0.0
    %91 = vmatprep.subr.mxu0 0.0
    %92 = vmatpush1.msra.mxu0 %v52
    %93 = vmatprep.subr.mxu0 0.0
    %94 = vmatpush1.msra.mxu0 %v51
    %95 = vmatprep.subr.mxu0 0.0
    %96 = vmatpush1.msra.mxu0 %v50
    %97 = vmatprep.subr.mxu0 0.0
    %98 = vmatpush1.msra.mxu0 %v49
    %99 = vmatprep.subr.mxu0 0.0
    %100 = vmatpush2.msra.mxu0 0.0
    %101 = vmatprep.subr.mxu0 0.0
    %102 = vmatpush2.msra.mxu0 0.0
    %103 = vmatprep.subr.mxu0 0.0
    %104 = vmatpush2.msra.mxu0 0.0
    %105 = vmatprep.subr.mxu0 0.0
    %106 = vmatpush2.msra.mxu0 0.0
    %107 = vmatprep.subr.mxu0 0.0
    %108 = vmatpush2.msra.mxu0 0.0
    %109 = vmatprep.subr.mxu0 0.0
    %110 = vmatpush2.msra.mxu0 0.0
    %111 = vmatprep.subr.mxu0 0.0
    %112 = vmatpush2.msra.mxu0 0.0
    %113 = vmatprep.subr.mxu0 0.0
    %114 = vmatpush2.msra.mxu0 0.0
    %115 = vmatprep.subr.mxu0 0.0
    %116 = vmatpush2.msra.mxu0 0.0
    %117 = vmatprep.subr.mxu0 0.0
    %118 = vmatpush2.msra.mxu0 0.0
    %119 = vmatprep.subr.mxu0 0.0
    %120 = vmatpush2.msra.mxu0 0.0
    %121 = vmatprep.subr.mxu0 0.0
    %122 = vmatpush2.msra.mxu0 0.0
    %123 = vmatprep.subr.mxu0 0.0
    %124 = vmatpush2.msra.mxu0 0.0
    %125 = vmatprep.subr.mxu0 0.0
    %126 = vmatpush2.msra.mxu0 0.0
    %127 = vmatprep.subr.mxu0 0.0
    %128 = vmatpush2.msra.mxu0 0.0
    %129 = vmatprep.subr.mxu0 0.0
    %130 = vmatpush2.msra.mxu0 0.0
    %131 = vmatprep.mubr.f32.mxu0 0.0
    %132 = vmatmul.mubr.f32.gmra.mxu0 %v62
    %v133 = vpop.f32.mrf.mxu0
    %v134 = vadd.f32 %v58, %v133
    %v135 = vpop.f32.mrf.mxu0
    %136 = vmatprep.mubr.f32.mxu0 0.0
    %137 = vmatmul.mubr.f32.gmra.mxu0 %v65
    %v138 = vpop.f32.mrf.mxu0
    %v139 = vadd.f32 %v58, %v138
    %v140 = vpop.f32.mrf.mxu0
    %141 = vdwg.mxu0
    %v142 = vmax.f32 %v134, 0.0
    %v143 = vmax.f32 %v139, 0.0
    %144 = vst [vmem:[#allocation7] sm:$0xff] %v142
    %145 = vst [vmem:[#allocation7 + $0x8] sm:$0xff] %v143
    %s146 = smul.u32 0, 16
    %v147 = vlaneseq
    %v148 = vshrl.u32 %v147, 7
    %v149 = vadd.s32 %v148, 8
    %v150 = vstv %s146
    %v151 = vadd.s32 %v150, %v148
    %v152 = vadd.s32 %v150, %v149
    %vm153 = vcmp.lt.s32.totalorder %v151, 12
    %vm154 = vcmp.lt.s32.totalorder %v152, 12
    %v155 = vsel %vm153, %v142, 0.0
    %v156 = vsel %vm154, %v143, 0.0
    %v157 = vadd.f32 %v155, %v156
    %v158 = vrot.slane %v157, 4
    %v159 = vadd.f32 %v157, %v158
    %v160 = vrot.slane %v159, 2
    %v161 = vadd.f32 %v159, %v160
    %v162 = vrot.slane %v161, 1
    %v163 = vadd.f32 %v161, %v162
    %164 = vst [vmem:[#allocation8] sm:$0x1] %v163
    %v165 = vmul.f32 %v155, %v155
    %v166 = vmul.f32 %v156, %v156
    %v167 = vadd.f32 %v165, %v166
    %v168 = vrot.slane %v167, 4
    %v169 = vadd.f32 %v167, %v168
    %v170 = vrot.slane %v169, 2
    %v171 = vadd.f32 %v169, %v170
    %v172 = vrot.slane %v171, 1
    %v173 = vadd.f32 %v171, %v172
    %174 = vst [vmem:[#allocation10] sm:$0x1] %v173
    // Predicated region
    $region22: #{tpu_custom_call.1} parent=1 // pred_check
      _
    $region23: #{tpu_custom_call.1} parent=1 // pred_check_branch
      %176 = sbr.rel (0) target = $region25
    $region24: #{tpu_custom_call.1} parent=1 // pred_region
      %s178 = ssub.s32 256, 256
      %179 = vsyncadd [#allocation4], %s178
      %s180 = sshll.u32 [#allocation7], 4
      %s181 = int_to_ptr.vmem [resolvable:$true] %s180
      %186 = dma.vmem_to_hbm [thread:$0]  %s181, 256, %s3, [#allocation4], 128, 128, 8
    $region25: #{tpu_custom_call.1} parent=1 // pred_fallthru
      _
    // Predicated region
    $region26: #{tpu_custom_call.1} parent=1 // pred_check
      _
    $region27: #{tpu_custom_call.1} parent=1 // pred_check_branch
      %188 = sbr.rel (0) target = $region29
    $region28: #{tpu_custom_call.1} parent=1 // pred_region
      %s190 = ssub.s32 16, 16
      %191 = vsyncadd [#allocation9], %s190
      %s193 = sshll.u32 [#allocation8], 4
      %s194 = int_to_ptr.vmem [resolvable:$true] %s193
      %196 = dma.vmem_to_hbm [thread:$0]  %s194, 16, %s4, [#allocation9]
    $region29: #{tpu_custom_call.1} parent=1 // pred_fallthru
      _
    // Predicated region
    $region30: #{tpu_custom_call.1} parent=1 // pred_check
      _
    $region31: #{tpu_custom_call.1} parent=1 // pred_check_branch
      %198 = sbr.rel (0) target = $region33
    $region32: #{tpu_custom_call.1} parent=1 // pred_region
      %s200 = ssub.s32 16, 16
      %201 = vsyncadd [#allocation9], %s200
      %s203 = sshll.u32 [#allocation10], 4
      %s204 = int_to_ptr.vmem [resolvable:$true] %s203
      %206 = dma.vmem_to_hbm [thread:$0]  %s204, 16, %s5, [#allocation9]
    $region33: #{tpu_custom_call.1} parent=1 // pred_fallthru
      _
    // Predicated region
    $region34: #{tpu_custom_call.1} parent=1 // pred_check
      _
    $region35: #{tpu_custom_call.1} parent=1 // pred_check_branch
      %208 = sbr.rel (0) target = $region37
    $region36: #{tpu_custom_call.1} parent=1 // pred_region
      %209 = dma.done [#allocation4], 256
    $region37: #{tpu_custom_call.1} parent=1 // pred_fallthru
      _
    // Predicated region
    $region38: #{tpu_custom_call.1} parent=1 // pred_check
      _
    $region39: #{tpu_custom_call.1} parent=1 // pred_check_branch
      %211 = sbr.rel (0) target = $region41
    $region40: #{tpu_custom_call.1} parent=1 // pred_region
      %212 = dma.done [#allocation9], 16
    $region41: #{tpu_custom_call.1} parent=1 // pred_fallthru
      _
    // Predicated region
    $region42: #{tpu_custom_call.1} parent=1 // pred_check
      _
    $region43: #{tpu_custom_call.1} parent=1 // pred_check_branch
      %214 = sbr.rel (0) target = $region45
    $region44: #{tpu_custom_call.1} parent=1 // pred_region
      %215 = dma.done [#allocation9], 16
    $region45: #{tpu_custom_call.1} parent=1 // pred_fallthru
      _
    %216 = vsyncpa [#allocation3], 1
    %217 = vsyncpa [#allocation6], 1
    %218 = vsyncpa [#allocation4], 1
    %219 = vsyncpa [#allocation9], 1

</llo_original>
